<compile_context>
chip_gen: v7x
topology: tpu7x:2x2x1
jax: 0.10.0
libtpu: 0.0.40
codegen_flags: <defaults>
</compile_context>

<pallas_src>
import math

import jax
import jax.numpy as jnp
from jax.experimental import pallas as pl
from jax.experimental.pallas import tpu as pltpu


def _flotr_kernel(x_ref, w_ref, o_ref):
    # Single fused matmul per row tile: (tm, in_dim) @ (in_dim, N_pad).
    o_ref[...] = jnp.dot(
        x_ref[...], w_ref[...], preferred_element_type=jnp.float32
    ).astype(o_ref.dtype)


def _round_up(n, m):
    return ((n + m - 1) // m) * m


def flotr_forward(x, lora_A, core_G, lora_B, *, layer_idx, scaling):
    """x: (..., in_dim) -> (..., out_dim), matching FLoTR.forward."""
    in_dim, rank = lora_A.shape
    rank_b, out_dim = lora_B.shape
    assert rank_b == rank
    assert x.shape[-1] == in_dim
    # Inherited from the PyTorch module: x @ lora_B.T requires rank == out_dim.
    assert rank == out_dim, "FLoTR forward requires rank == out_dim"

    lead = x.shape[:-1]
    M = int(math.prod(lead)) if lead else 1
    x2 = x.reshape(M, in_dim)
    itemsize = jnp.dtype(x.dtype).itemsize

    # --- Fused weight (one-time XLA ops, tiny rank-sized matmuls) ------------
    # Per-layer core slice works for static or traced layer_idx.
    G_s = jax.lax.dynamic_index_in_dim(core_G, layer_idx, axis=1, keepdims=False)
    Wf = (lora_A.astype(jnp.float32) @ G_s.T.astype(jnp.float32)) @ lora_B.T.astype(jnp.float32)
    Wf = Wf * jnp.asarray(scaling, jnp.float32)   # traced-scaling safe
    W = Wf.astype(x.dtype)                        # stays f32 if x is f32

    # Lane-dense output: pad the narrow (rank-wide) output dim to a 128 multiple
    # so the output stores are full-lane unmasked vst.  Padding W is negligible.
    N_pad = _round_up(out_dim, 128)
    if N_pad != out_dim:
        W = jnp.pad(W, ((0, 0), (0, N_pad - out_dim)))

    # --- Row-tile sizing from a VMEM byte budget ------------------------------
    sub = 16                                     # sublane multiple (covers bf16 packing)
    X_BUDGET = 20 << 20                          # bytes for the double-buffered x tile
    tm = X_BUDGET // (2 * in_dim * itemsize)
    tm = max(sub, min(1024, (tm // sub) * sub))  # clamp to [16, 1024] rows
    tm = min(tm, _round_up(M, sub))              # never bigger than the (rounded) row count

    # Guarantee >=2 grid steps for large M so v7x's second TensorCore is used.
    if -(-M // tm) < 2 and M > sub:
        half = _round_up(-(-M // 2), sub)
        if half >= sub:
            tm = half

    grid = (pl.cdiv(M, tm),)

    # VMEM footprint: double-buffered x tile + double-buffered out tile + W.
    needed = itemsize * (2 * tm * in_dim + 2 * tm * N_pad + 2 * in_dim * N_pad)
    vmem_limit = int(min(60 << 20, max(24 << 20, needed + (4 << 20))))

    cost = pl.CostEstimate(
        flops=2 * M * in_dim * N_pad,
        transcendentals=0,
        bytes_accessed=itemsize * (M * in_dim + in_dim * N_pad + M * N_pad),
    )

    out = pl.pallas_call(
        _flotr_kernel,
        out_shape=jax.ShapeDtypeStruct((M, N_pad), x.dtype),
        grid=grid,
        in_specs=[
            pl.BlockSpec((tm, in_dim), lambda i: (i, 0)),    # x rows (streamed)
            pl.BlockSpec((in_dim, N_pad), lambda i: (0, 0)), # fused W (resident)
        ],
        out_specs=pl.BlockSpec((tm, N_pad), lambda i: (i, 0)),
        compiler_params=pltpu.CompilerParams(
            dimension_semantics=("parallel",),
            vmem_limit_bytes=vmem_limit,
        ),
        cost_estimate=cost,
    )(x2, W)

    out = out[:, :out_dim]
    return out.reshape(*lead, out_dim)


if __name__ == "__main__":
    # Small shapes consistent with the module (out_dim == rank, as the PyTorch
    # forward requires).
    batch, seq = 2, 8
    in_dim, rank, out_dim, num_layers = 32, 8, 8, 4
    alpha = 16.0
    scaling = alpha / rank        # = 2.0
    layer_idx = 2
    dtype = jnp.float32

    key = jax.random.PRNGKey(0)
    kx, ka, kb, kg = jax.random.split(key, 4)

    x = jax.random.normal(kx, (batch, seq, in_dim), dtype=dtype)

    # kaiming_uniform_(a=sqrt(5)) on (in_dim, rank): U(-b, b), b = 1/sqrt(fan_in),
    # torch fan_in = size(1) = rank.
    bound = 1.0 / math.sqrt(rank)
    lora_A = jax.random.uniform(ka, (in_dim, rank), dtype=dtype,
                                minval=-bound, maxval=bound)
    # PyTorch inits lora_B and core_G to zeros (output would be identically zero);
    # use small deterministic random values so the numerical check is non-trivial.
    lora_B = 0.02 * jax.random.normal(kb, (rank, out_dim), dtype=dtype)
    core_G = 0.02 * jax.random.normal(kg, (rank, num_layers, rank), dtype=dtype)

    y = flotr_forward(x, lora_A, core_G, lora_B,
                      layer_idx=layer_idx, scaling=scaling)
    y = jax.block_until_ready(y)

    # pure-JAX reference (same math as FLoTR.forward)
    G_s = core_G[:, layer_idx, :]
    ref = scaling * (((x @ lora_A) @ G_s.T) @ lora_B.T)

    assert y.shape == (batch, seq, out_dim)
    assert jnp.allclose(y, ref, atol=1e-5, rtol=1e-5), "mismatch vs reference"

    print("KERNEL_OK")
</pallas_src>

<mosaic_0001>
module attributes {stable_mosaic.version = 11 : i64} {
  func.func @_flotr_kernel(%arg0: i32, %arg1: memref<16x32xf32, #tpu.memory_space<vmem>>, %arg2: memref<32x128xf32, #tpu.memory_space<vmem>>, %arg3: memref<16x128xf32, #tpu.memory_space<vmem>>) attributes {dimension_semantics = [#tpu.dimension_semantics<parallel>], iteration_bounds = array<i64: 1>, scalar_prefetch = 0 : i64, scratch_operands = 0 : i64, tpu.core_type = #tpu.core_type<tc>, window_params = [{transform_indices = @transform_0, window_bounds = array<i64: 16, 32>}, {pipeline_mode = #tpu.pipeline_mode<synchronous>, transform_indices = @transform_1, window_bounds = array<i64: 32, 128>}, {transform_indices = @transform_2, window_bounds = array<i64: 16, 128>}]} {
    %c0 = arith.constant 0 : index
    %c0_0 = arith.constant 0 : index
    %0 = vector.load %arg1[%c0, %c0_0] : memref<16x32xf32, #tpu.memory_space<vmem>>, vector<16x32xf32>
    %c0_1 = arith.constant 0 : index
    %c0_2 = arith.constant 0 : index
    %1 = vector.load %arg2[%c0_1, %c0_2] : memref<32x128xf32, #tpu.memory_space<vmem>>, vector<32x128xf32>
    %cst = arith.constant dense<0.000000e+00> : vector<16x128xf32>
    %2 = tpu.matmul %0, %1, %cst {dimension_numbers = #tpu.dot_dimension_numbers<[1], [0], [0], [1], [0, 0, 1, 1], [], []>} : vector<16x32xf32>, vector<32x128xf32>, vector<16x128xf32> -> vector<16x128xf32>
    %c0_3 = arith.constant 0 : index
    %c0_4 = arith.constant 0 : index
    %3 = vector.load %arg3[%c0_3, %c0_4] : memref<16x128xf32, #tpu.memory_space<vmem>>, vector<16x128xf32>
    tpu.vector_store %arg3[%c0_3, %c0_4], %2 {strides = array<i32>} : memref<16x128xf32, #tpu.memory_space<vmem>>, vector<16x128xf32>,
    return
  }
  func.func @transform_0(%arg0: i32) -> (i32, i32) {
    %c0_i32 = arith.constant 0 : i32
    %c0_i32_0 = arith.constant 0 : i32
    return %arg0, %c0_i32 : i32, i32
  }
  func.func @transform_1(%arg0: i32) -> (i32, i32) {
    %c0_i32 = arith.constant 0 : i32
    %c0_i32_0 = arith.constant 0 : i32
    %c0_i32_1 = arith.constant 0 : i32
    return %c0_i32, %c0_i32_0 : i32, i32
  }
  func.func @transform_2(%arg0: i32) -> (i32, i32) {
    %c0_i32 = arith.constant 0 : i32
    %c0_i32_0 = arith.constant 0 : i32
    return %arg0, %c0_i32 : i32, i32
  }
}

</mosaic_0001>

<llo_original>
// kernel: tpu_custom_call.1
$region0: #{tpu_custom_call.1}
  #allocation0 [shape = 'u32[]', space=smem, size = 0x4, offset = 0x4, fixed_abs, tag = 'smem constant byte address 0x4 - core index']
  #allocation1 [shape = 'u32[144,128]{1,0:T(1,128)}', space=vmem, size = 0x12000, scoped, tag = 'internal scratch']
  %s0 = inlined_call_operand.hbm [shape: f32[16,32], index: 0, kind: input, shape index: {}]
  %s1 = inlined_call_operand.hbm [shape: f32[32,128], index: 1, kind: input, shape index: {}]
  %s2 = inlined_call_operand.hbm [shape: f32[16,128], index: 2, kind: output, shape index: {}]
  %s3 = sld [smem:[#allocation0]]
  $region26: #{tpu_custom_call.1} parent=0
    _
  %s5 = ssub.s32 1, %s3
  %s6 = scalar_select 0, %s5, %s3
  $region1: #{tpu_custom_call.1} parent=0
    #allocation2 [shape = 'u8[8192]{0}', space=vmem, size = 0x2000, scoped, tag = 'input window, operand 0, single buffered']
    #allocation3 [shape = 's32[1]{0}', space=sflag, size = 0x4, scoped, tag = 'scoped memory for tpu_custom_call.1']
    #allocation4 [shape = 's32[1]{0}', space=sflag, size = 0x4, scoped, tag = 'scoped memory for tpu_custom_call.1']
    #allocation5 [shape = 'u8[16384]{0}', space=vmem, size = 0x4000, scoped, tag = 'input window, operand 1, single buffered']
    #allocation6 [shape = 's32[1]{0}', space=sflag, size = 0x4, scoped, tag = 'scoped memory for tpu_custom_call.1']
    #allocation7 [shape = 'u8[8192]{0}', space=vmem, size = 0x2000, scoped, tag = 'output window, operand 0, single buffered']
    %7 = vsyncpa [#allocation3], 0
    %8 = vsyncpa [#allocation6], 0
    %9 = vsyncpa [#allocation4], 0
    // Predicated region
    $region2: #{tpu_custom_call.1} parent=1 // pred_check
      _
    $region3: #{tpu_custom_call.1} parent=1 // pred_check_branch
      %11 = sbr.rel (0) target = $region5
    $region4: #{tpu_custom_call.1} parent=1 // pred_region
      %s13 = ssub.s32 256, 256
      %14 = vsyncadd [#allocation3], %s13
      %s15 = sshll.u32 [#allocation2], 4
      %s16 = int_to_ptr.vmem [resolvable:$true] %s15
      %21 = dma.hbm_to_vmem [thread:$0]  %s0, 256, %s16, [#allocation3], 128, 128, 8
    $region5: #{tpu_custom_call.1} parent=1 // pred_fallthru
      _
    // Predicated region
    $region6: #{tpu_custom_call.1} parent=1 // pred_check
      _
    $region7: #{tpu_custom_call.1} parent=1 // pred_check_branch
      %23 = sbr.rel (0) target = $region9
    $region8: #{tpu_custom_call.1} parent=1 // pred_region
      %s25 = ssub.s32 512, 512
      %26 = vsyncadd [#allocation6], %s25
      %s27 = sshll.u32 [#allocation5], 4
      %s28 = int_to_ptr.vmem [resolvable:$true] %s27
      %33 = dma.hbm_to_vmem [thread:$0]  %s1, 512, %s28, [#allocation6], 128, 128, 8
    $region9: #{tpu_custom_call.1} parent=1 // pred_fallthru
      _
    // Predicated region
    $region10: #{tpu_custom_call.1} parent=1 // pred_check
      _
    $region11: #{tpu_custom_call.1} parent=1 // pred_check_branch
      %35 = sbr.rel (0) target = $region13
    $region12: #{tpu_custom_call.1} parent=1 // pred_region
      %36 = dma.done [#allocation3], 256
    $region13: #{tpu_custom_call.1} parent=1 // pred_fallthru
      _
    // Predicated region
    $region14: #{tpu_custom_call.1} parent=1 // pred_check
      _
    $region15: #{tpu_custom_call.1} parent=1 // pred_check_branch
      %38 = sbr.rel (0) target = $region17
    $region16: #{tpu_custom_call.1} parent=1 // pred_region
      %39 = dma.done [#allocation6], 512
    $region17: #{tpu_custom_call.1} parent=1 // pred_fallthru
      _
    %v40 = vld [vmem:[#allocation2] sm:$0xff]
    %v41 = vld [vmem:[#allocation2 + $0x8] sm:$0xff]
    %v42 = vld [vmem:[#allocation5] sm:$0xff]
    %v43 = vld [vmem:[#allocation5 + $0x8] sm:$0xff]
    %v44 = vld [vmem:[#allocation5 + $0x10] sm:$0xff]
    %v45 = vld [vmem:[#allocation5 + $0x18] sm:$0xff]
    %vm46 = vcmask 261120
    %v48 = vsel %vm46, %v40, 0
    %v51 = vsel %vm46, %v41, 0
    %53 = vmatprep.subr.mxu0 0.0
    %54 = vmatpush1.msra.mxu0 %v42
    %55 = vmatprep.subr.mxu0 0.0
    %56 = vmatpush1.msra.mxu0 %v43
    %57 = vmatprep.subr.mxu0 0.0
    %58 = vmatpush1.msra.mxu0 %v44
    %59 = vmatprep.subr.mxu0 0.0
    %60 = vmatpush1.msra.mxu0 %v45
    %61 = vmatprep.subr.mxu0 0.0
    %62 = vmatpush1.msra.mxu0 0.0
    %63 = vmatprep.subr.mxu0 0.0
    %64 = vmatpush1.msra.mxu0 0.0
    %65 = vmatprep.subr.mxu0 0.0
    %66 = vmatpush1.msra.mxu0 0.0
    %67 = vmatprep.subr.mxu0 0.0
    %68 = vmatpush1.msra.mxu0 0.0
    %69 = vmatprep.subr.mxu0 0.0
    %70 = vmatpush1.msra.mxu0 0.0
    %71 = vmatprep.subr.mxu0 0.0
    %72 = vmatpush1.msra.mxu0 0.0
    %73 = vmatprep.subr.mxu0 0.0
    %74 = vmatpush1.msra.mxu0 0.0
    %75 = vmatprep.subr.mxu0 0.0
    %76 = vmatpush1.msra.mxu0 0.0
    %77 = vmatprep.subr.mxu0 0.0
    %78 = vmatpush1.msra.mxu0 0.0
    %79 = vmatprep.subr.mxu0 0.0
    %80 = vmatpush1.msra.mxu0 0.0
    %81 = vmatprep.subr.mxu0 0.0
    %82 = vmatpush1.msra.mxu0 0.0
    %83 = vmatprep.subr.mxu0 0.0
    %84 = vmatpush1.msra.mxu0 0.0
    %85 = vmatprep.subr.mxu0 0.0
    %86 = vmatpush1.msra.mxu0 0.0
    %87 = vmatprep.subr.mxu0 0.0
    %88 = vmatpush1.msra.mxu0 0.0
    %89 = vmatprep.subr.mxu0 0.0
    %90 = vmatpush1.msra.mxu0 0.0
    %91 = vmatprep.subr.mxu0 0.0
    %92 = vmatpush1.msra.mxu0 0.0
    %93 = vmatprep.subr.mxu0 0.0
    %94 = vmatpush1.msra.mxu0 0.0
    %95 = vmatprep.subr.mxu0 0.0
    %96 = vmatpush1.msra.mxu0 0.0
    %97 = vmatprep.subr.mxu0 0.0
    %98 = vmatpush1.msra.mxu0 0.0
    %99 = vmatprep.subr.mxu0 0.0
    %100 = vmatpush1.msra.mxu0 0.0
    %101 = vmatprep.subr.mxu0 0.0
    %102 = vmatpush1.msra.mxu0 0.0
    %103 = vmatprep.subr.mxu0 0.0
    %104 = vmatpush1.msra.mxu0 0.0
    %105 = vmatprep.subr.mxu0 0.0
    %106 = vmatpush1.msra.mxu0 0.0
    %107 = vmatprep.subr.mxu0 0.0
    %108 = vmatpush1.msra.mxu0 0.0
    %109 = vmatprep.subr.mxu0 0.0
    %110 = vmatpush1.msra.mxu0 0.0
    %111 = vmatprep.subr.mxu0 0.0
    %112 = vmatpush1.msra.mxu0 0.0
    %113 = vmatprep.subr.mxu0 0.0
    %114 = vmatpush1.msra.mxu0 0.0
    %115 = vmatprep.subr.mxu0 0.0
    %116 = vmatpush1.msra.mxu0 0.0
    %117 = vmatprep.mubr.f32.mxu0 0.0
    %118 = vmatmul.mubr.f32.gmra.mrb[0].mxu0 %v48
    %v119 = vpop.f32.mrb[0].mxu0
    %v120 = vadd.f32 0.0, %v119
    %v121 = vpop.f32.mrb[0].mxu0
    %122 = vmatprep.mubr.f32.mxu0 0.0
    %123 = vmatmul.mubr.f32.gmra.mrb[0].mxu0 %v51
    %v124 = vpop.f32.mrb[0].mxu0
    %v125 = vadd.f32 0.0, %v124
    %v126 = vpop.f32.mrb[0].mxu0
    %127 = vdwg.mxu0
    %128 = vst [vmem:[#allocation7] sm:$0xff] %v120
    %129 = vst [vmem:[#allocation7 + $0x8] sm:$0xff] %v125
    // Predicated region
    $region18: #{tpu_custom_call.1} parent=1 // pred_check
      _
    $region19: #{tpu_custom_call.1} parent=1 // pred_check_branch
      %131 = sbr.rel (0) target = $region21
    $region20: #{tpu_custom_call.1} parent=1 // pred_region
      %s133 = ssub.s32 256, 256
      %134 = vsyncadd [#allocation4], %s133
      %s135 = sshll.u32 [#allocation7], 4
      %s136 = int_to_ptr.vmem [resolvable:$true] %s135
      %141 = dma.vmem_to_hbm [thread:$0]  %s136, 256, %s2, [#allocation4], 128, 128, 8
    $region21: #{tpu_custom_call.1} parent=1 // pred_fallthru
      _
    // Predicated region
    $region22: #{tpu_custom_call.1} parent=1 // pred_check
      _
    $region23: #{tpu_custom_call.1} parent=1 // pred_check_branch
      %143 = sbr.rel (0) target = $region25
    $region24: #{tpu_custom_call.1} parent=1 // pred_region
      %144 = dma.done [#allocation4], 256
    $region25: #{tpu_custom_call.1} parent=1 // pred_fallthru
      _
    %145 = vsyncpa [#allocation3], 1
    %146 = vsyncpa [#allocation6], 1
    %147 = vsyncpa [#allocation4], 1

</llo_original>
